<compile_context>
chip_gen: v5e
topology: v5e:2x2
jax: 0.10.0
libtpu: 0.0.40
codegen_flags: <defaults>
</compile_context>

<pallas_src>
import functools

import jax
import jax.numpy as jnp
import numpy as np
from jax.experimental import pallas as pl
from jax.experimental.pallas import tpu as pltpu


# --------------------------------------------------------------------------- #
# Kernel
# --------------------------------------------------------------------------- #
def _global_attn_kernel(qd_ref, md_ref, qm_ref, km_ref,
                        qw_ref, kvw_ref, gw_ref, gb_ref, ow_ref, ob_ref,
                        out_ref, *, num_head, key_dim, value_dim,
                        ew_dtype, flat_out):
    f32 = jnp.float32
    Bb, Q, A = qd_ref.shape
    K, Av = md_ref.shape[1], md_ref.shape[2]
    H, Kd, Vd = num_head, key_dim, value_dim
    HVd = H * Vd
    O = ob_ref.shape[1]

    qd = qd_ref[...]                         # [Bb, Q, A]   compute dtype (bf16)
    md = md_ref[...]                         # [Bb, K, Av]  compute dtype
    qm = qm_ref[...].astype(f32)             # [Bb, Q, A]   0/1 mask -> f32
    km = km_ref[...]                         # [Bb, K]      f32 key mask = q_mask[:, :, 0]

    # ---- fused K/V projection: one [Bb*K, Av] @ [Av, Kd+Vd] MXU matmul ------
    md2 = md.reshape(Bb * K, Av)                                   # leading-dim merge only
    kv = jnp.dot(md2, kvw_ref[...], preferred_element_type=f32)    # [Bb*K, Kd+Vd]
    k3 = kv[:, :Kd].reshape(Bb, K, Kd)                             # [Bb, K, Kd]
    v3 = kv[:, Kd:].reshape(Bb, K, Vd)                             # [Bb, K, Vd]

    # ---- mask_mean over the query axis (f32 on the VPU) ---------------------
    num = jnp.sum(qm * qd.astype(f32), axis=1)                     # [Bb, A]
    den = jnp.sum(qm, axis=1)                                      # [Bb, A]
    q_avg = num * pl.reciprocal(den + 1e-10, approx=True)          # [Bb, A]

    # ---- all-head query projection: one [Bb, A] @ [A, H*Kd] matmul ----------
    scale = key_dim ** (-0.5)
    q_all = jnp.dot(q_avg.astype(qw_ref.dtype), qw_ref[...],
                    preferred_element_type=f32) * scale            # [Bb, H*Kd]
    # Split heads with lane slices + stack (avoids a minor-dim reshape).
    q_r = jnp.stack([q_all[:, h * Kd:(h + 1) * Kd] for h in range(H)],
                    axis=1)                                        # [Bb, H, Kd]

    # bias = 1e9 * (q_mask[:, :, 0] - 1): one value per key position.
    # Fully-masked / padded rows give a uniform softmax (no NaNs) and are
    # sliced off by the wrapper.
    bias = 1e9 * (km - 1.0)                                        # [Bb, K]

    # ---- single-query attention pooling, head-batched on the MXU ------------
    # K lives in the lane axis of the logits, so softmax reduces are lane-dense.
    logits = jnp.einsum('bhc,bkc->bhk', q_r, k3,
                        preferred_element_type=f32) + bias[:, None, :]   # [Bb, H, K]
    m = jnp.max(logits, axis=-1, keepdims=True)
    p = jnp.exp(logits - m)
    w = p * pl.reciprocal(jnp.sum(p, axis=-1, keepdims=True), approx=True)
    wavg = jnp.einsum('bhk,bkc->bhc', w, v3,
                      preferred_element_type=f32)                  # [Bb, H, Vd]
    # Merge heads back to a flat lane axis with a lane concat (no reshape).
    wavg2 = jnp.concatenate([wavg[:, h, :] for h in range(H)], axis=-1)  # [Bb, H*Vd]

    # ---- gating: one [Bb*Q, A] @ [A, H*Vd] matmul; sigmoid in ew_dtype ------
    qd2 = qd.reshape(Bb * Q, A)
    gate_logits = (jnp.dot(qd2, gw_ref[...], preferred_element_type=f32)
                   + gb_ref[...].astype(f32))                      # [Bb*Q, H*Vd]
    gate = jax.nn.sigmoid(gate_logits.astype(ew_dtype))            # bf16 on v6e/v7x
    weighted = gate.reshape(Bb, Q, HVd) * wavg2[:, None, :].astype(ew_dtype)
    weighted2 = weighted.reshape(Bb * Q, HVd).astype(ow_ref.dtype)

    # ---- output projection: one [Bb*Q, H*Vd] @ [H*Vd, O] matmul -------------
    out2 = (jnp.dot(weighted2, ow_ref[...], preferred_element_type=f32)
            + ob_ref[...].astype(f32))                             # [Bb*Q, O]
    out3 = out2.reshape(Bb, Q, O)                                  # leading-dim split only
    if flat_out:
        # Lane-dense store: assemble [Bb, Q*O] (Q*O % 128 == 0) via lane concat.
        out_ref[...] = jnp.concatenate(
            [out3[:, i, :] for i in range(Q)], axis=-1).astype(out_ref.dtype)
    else:
        out_ref[...] = out3.astype(out_ref.dtype)


# --------------------------------------------------------------------------- #
# Device profile (generation-aware VMEM / dtype policy)
# --------------------------------------------------------------------------- #
def _device_profile():
    kind = ""
    try:
        dev = jax.devices()[0]
        if dev.platform == "tpu":
            kind = str(dev.device_kind).lower()
    except Exception:
        pass
    if ("v7" in kind) or ("tpu7" in kind) or ("7x" in kind):
        gen = 7
    elif "v6" in kind:
        gen = 6
    elif "v5" in kind:
        gen = 5
    elif "v4" in kind:
        gen = 4
    else:
        gen = 0

    vmem_cap = None
    try:
        vmem_cap = int(pltpu.get_tpu_info().vmem_capacity_bytes)
    except Exception:
        vmem_cap = None
    if vmem_cap is None:
        vmem_cap = {7: 64, 6: 128, 5: 128, 4: 128}.get(gen, 64) * 1024 * 1024

    if gen >= 7:
        vmem_limit = 48 * 1024 * 1024         # v7x: 64 MiB physical
    elif gen in (5, 6):
        vmem_limit = 96 * 1024 * 1024         # v5e/v6e: 128 MiB physical
    elif gen == 4:
        vmem_limit = 64 * 1024 * 1024
    else:
        vmem_limit = 32 * 1024 * 1024         # unknown -> conservative
    vmem_limit = min(vmem_limit, (vmem_cap * 3) // 4)

    return dict(
        gen=gen,
        vmem_limit=int(vmem_limit),
        ew_dtype=(jnp.bfloat16 if gen >= 6 else jnp.float32),  # v5e: f32 VPU/EUP only
        split_for_two_cores=(gen >= 7),                        # v7x: 2 TensorCores
    )


# --------------------------------------------------------------------------- #
# Wrapper
# --------------------------------------------------------------------------- #
def global_attention(q_data, m_data, q_mask, bias_unused, params, *,
                     block_b=None, compute_dtype=jnp.bfloat16,
                     mask_dtype=None):
    """Pallas implementation of GlobalAttention.forward (gating=True)."""
    del bias_unused  # the PyTorch forward overwrites `bias`; argument is ignored
    B, Q, A = q_data.shape
    Bm, K, Av = m_data.shape
    assert Bm == B and q_mask.shape == (B, Q, A)
    if Q != K:
        # The reference's bias broadcast (q_mask[:, None, :, 0] added to [B,H,K]
        # logits) only makes sense when num_queries == num_keys.
        raise ValueError(f"GlobalAttention requires num_queries == num_keys, got {Q} vs {K}")

    qw = params["q_weights"]        # [A, H, Kd]
    kw = params["k_weights"]        # [Av, Kd]
    vw = params["v_weights"]        # [Av, Vd]
    ow = params["o_weights"]        # [H, Vd, O]
    ob = params["o_bias"]           # [O]
    gw = params["gating_w"]         # [A, H, Vd]
    gb = params["gating_b"]         # [H, Vd]
    H, Kd = qw.shape[1], qw.shape[2]
    Vd = vw.shape[1]
    O = ob.shape[0]
    HVd = H * Vd
    out_dtype = q_data.dtype
    # bf16 mask is exact for 0/1 masks (the AlphaFold case); pass
    # mask_dtype=jnp.float32 if fractional masks must be preserved exactly.
    mask_dtype = compute_dtype if mask_dtype is None else mask_dtype

    prof = _device_profile()
    ew_dtype = prof["ew_dtype"]

    # Head-fused 2-D weight layouts; K/V projections fused into one matmul.
    qw2 = qw.reshape(A, H * Kd).astype(compute_dtype)
    kvw = jnp.concatenate([kw, vw], axis=-1).astype(compute_dtype)   # [Av, Kd+Vd]
    gw2 = gw.reshape(A, HVd).astype(compute_dtype)
    gb2 = gb.reshape(1, HVd).astype(jnp.float32)
    ow2 = ow.reshape(HVd, O).astype(compute_dtype)
    ob2 = ob.reshape(1, O).astype(jnp.float32)

    # Lane-dense output layout when the flattened row is 128-aligned.
    # TODO(synk): for very large Q the flatten should use a single reshape
    # instead of Q lane-slices; fall back to the 3-D output layout there.
    flat_out = (O % 128 != 0) and ((Q * O) % 128 == 0) and (Q <= 64)

    # ---- batch blocking: size the block against the real VMEM budget. -------
    if block_b is None:
        budget = prof["vmem_limit"] // 2          # headroom for compiler scratch
        cdsz = np.dtype(compute_dtype).itemsize
        osz = np.dtype(out_dtype).itemsize
        # Per-batch-element bytes: 2x double-buffered blocked I/O + f32 temps
        # (f32 copies of q_data/q_mask, fused k/v projection, logits/softmax,
        #  gate/weighted buffers, output staging).
        per_b = (2 * (2 * Q * A * cdsz + K * Av * cdsz + K * 4 + Q * O * osz)
                 + 4 * (2 * Q * A + K * (Kd + Vd) + 4 * H * K
                        + 3 * Q * HVd + 2 * Q * O))
        w_bytes = 4 * (A * H * Kd + Av * (Kd + Vd) + A * HVd + HVd + HVd * O + O)
        block_b = max(1, (budget - 2 * w_bytes) // max(per_b, 1))
        block_b = min(int(block_b), 1024)
        if prof["split_for_two_cores"] and B >= 16:
            # v7x: keep >= 2 grid blocks so both TensorCores get work.
            half = ((B + 1) // 2 + 7) // 8 * 8
            block_b = min(block_b, half)

    block_b = int(block_b)
    if block_b >= B:
        block_b = B                                   # single block -> full-extent specs
    else:
        block_b = max(8, (block_b // 8) * 8)          # keep 2-D blocks sublane-aligned
    num_blocks = -(-B // block_b)
    Bp = num_blocks * block_b

    if Bp != B:  # pad the batch axis; padded rows are fully masked and dropped at the end
        pad = [(0, Bp - B), (0, 0), (0, 0)]
        q_data_p = jnp.pad(q_data, pad)
        m_data_p = jnp.pad(m_data, pad)
        q_mask_p = jnp.pad(q_mask, pad)
    else:
        q_data_p, m_data_p, q_mask_p = q_data, m_data, q_mask

    qd = q_data_p.astype(compute_dtype)
    md = m_data_p.astype(compute_dtype)
    qm = q_mask_p.astype(mask_dtype)                  # bf16 mask: half the HBM traffic
    km = q_mask_p[:, :, 0].astype(jnp.float32)        # [Bp, K] key mask (lane-0 slice,
                                                      # done wrapper-side; tiny at f32)

    kernel = functools.partial(
        _global_attn_kernel, num_head=H, key_dim=Kd, value_dim=Vd,
        ew_dtype=ew_dtype, flat_out=flat_out)

    if flat_out:
        out_shape = jax.ShapeDtypeStruct((Bp, Q * O), out_dtype)
        out_spec = pl.BlockSpec((block_b, Q * O), lambda b: (b, 0))
    else:
        out_shape = jax.ShapeDtypeStruct((Bp, Q, O), out_dtype)
        out_spec = pl.BlockSpec((block_b, Q, O), lambda b: (b, 0, 0))

    out = pl.pallas_call(
        kernel,
        out_shape=out_shape,
        grid_spec=pltpu.PrefetchScalarGridSpec(
            num_scalar_prefetch=0,
            grid=(num_blocks,),
            in_specs=[
                pl.BlockSpec((block_b, Q, A), lambda b: (b, 0, 0)),    # q_data
                pl.BlockSpec((block_b, K, Av), lambda b: (b, 0, 0)),   # m_data
                pl.BlockSpec((block_b, Q, A), lambda b: (b, 0, 0)),    # q_mask (bf16)
                pl.BlockSpec((block_b, K), lambda b: (b, 0)),          # key mask
                pl.BlockSpec((A, H * Kd), lambda b: (0, 0)),           # q_weights (head-fused)
                pl.BlockSpec((Av, Kd + Vd), lambda b: (0, 0)),         # fused k|v weights
                pl.BlockSpec((A, HVd), lambda b: (0, 0)),              # gating_w (head-fused)
                pl.BlockSpec((1, HVd), lambda b: (0, 0)),              # gating_b
                pl.BlockSpec((HVd, O), lambda b: (0, 0)),              # o_weights (head-fused)
                pl.BlockSpec((1, O), lambda b: (0, 0)),                # o_bias
            ],
            out_specs=out_spec,
        ),
        compiler_params=pltpu.CompilerParams(
            dimension_semantics=("parallel",),
            vmem_limit_bytes=prof["vmem_limit"],
        ),
    )(qd, md, qm, km, qw2, kvw, gw2, gb2, ow2, ob2)

    if Bp != B:
        out = out[:B]
    if flat_out:
        out = out.reshape(B, Q, O)
    return out


# --------------------------------------------------------------------------- #
# Pure-JAX reference (mirrors the PyTorch forward exactly, f32)
# --------------------------------------------------------------------------- #
def global_attention_ref(q_data, m_data, q_mask, params):
    qw, kw, vw = params["q_weights"], params["k_weights"], params["v_weights"]
    ow, ob = params["o_weights"], params["o_bias"]
    gw, gb = params["gating_w"], params["gating_b"]
    key_dim = qw.shape[-1]
    v = jnp.einsum("bka,ac->bkc", m_data, vw)
    q_avg = jnp.sum(q_mask * q_data, axis=1) / (jnp.sum(q_mask, axis=1) + 1e-10)
    q = jnp.einsum("ba,ahc->bhc", q_avg, qw) * key_dim ** (-0.5)
    k = jnp.einsum("bka,ac->bkc", m_data, kw)
    bias = 1e9 * (q_mask[:, None, :, 0] - 1.0)
    logits = jnp.einsum("bhc,bkc->bhk", q, k) + bias
    weights = jax.nn.softmax(logits, axis=-1)
    weighted_avg = jnp.einsum("bhk,bkc->bhc", weights, v)
    gate = jax.nn.sigmoid(jnp.einsum("bqc,chv->bqhv", q_data, gw) + gb)
    weighted_avg = weighted_avg[:, None] * gate
    return jnp.einsum("bqhc,hco->bqo", weighted_avg, ow) + ob


if __name__ == "__main__":
    # Shapes consistent with the module: num_queries == num_keys (required by
    # the bias broadcast in the original forward).
    Q, H = 8, 4
    key_dim, value_dim, output_dim = 8, 8, 16
    A = H * key_dim        # all_key_dim   = 32
    Av = H * value_dim     # all_value_dim = 32

    root = jax.random.PRNGKey(0)
    ks = jax.random.split(root, 9)

    # Deterministic synthetic parameters (module shapes; gating_b = ones as in __init__).
    params = dict(
        q_weights=0.1 * jax.random.normal(ks[3], (A, H, key_dim), jnp.float32),
        k_weights=0.1 * jax.random.normal(ks[4], (Av, key_dim), jnp.float32),
        v_weights=0.1 * jax.random.normal(ks[5], (Av, value_dim), jnp.float32),
        o_weights=0.1 * jax.random.normal(ks[6], (H, value_dim, output_dim), jnp.float32),
        o_bias=0.1 * jax.random.normal(ks[7], (output_dim,), jnp.float32),
        gating_w=0.1 * jax.random.normal(ks[8], (A, H, value_dim), jnp.float32),
        gating_b=jnp.ones((H, value_dim), jnp.float32),
    )

    def run_case(B, block_b=None):
        kk = jax.random.split(jax.random.fold_in(root, B), 3)
        q_data = jax.random.normal(kk[0], (B, Q, A), jnp.float32)
        m_data = jax.random.normal(kk[1], (B, Q, Av), jnp.float32)
        q_mask = (jax.random.uniform(kk[2], (B, Q, A)) > 0.2).astype(jnp.float32)
        bias_in = jnp.zeros((B, Q, Q), jnp.float32)   # ignored by forward (overwritten)
        out = global_attention(q_data, m_data, q_mask, bias_in, params, block_b=block_b)
        out = jax.block_until_ready(out)
        ref = global_attention_ref(q_data, m_data, q_mask, params)
        assert out.shape == (B, Q, output_dim), out.shape
        np.testing.assert_allclose(np.asarray(out), np.asarray(ref), rtol=2e-2, atol=2e-2)

    run_case(B=2)                     # small case: single batch block
    run_case(B=20, block_b=8)         # blocked + padded batch path (3 grid steps)
    run_case(B=20)                    # auto block sizing (v7x path splits for 2 cores)
    print("KERNEL_OK")
</pallas_src>

<mosaic_0001>
module attributes {stable_mosaic.version = 11 : i64} {
  func.func @_global_attn_kernel(%arg0: i32, %arg1: memref<2x8x32xbf16, #tpu.memory_space<vmem>>, %arg2: memref<2x8x32xbf16, #tpu.memory_space<vmem>>, %arg3: memref<2x8x32xbf16, #tpu.memory_space<vmem>>, %arg4: memref<2x8xf32, #tpu.memory_space<vmem>>, %arg5: memref<32x32xbf16, #tpu.memory_space<vmem>>, %arg6: memref<32x16xbf16, #tpu.memory_space<vmem>>, %arg7: memref<32x32xbf16, #tpu.memory_space<vmem>>, %arg8: memref<1x32xf32, #tpu.memory_space<vmem>>, %arg9: memref<32x16xbf16, #tpu.memory_space<vmem>>, %arg10: memref<1x16xf32, #tpu.memory_space<vmem>>, %arg11: memref<2x128xf32, #tpu.memory_space<vmem>>) attributes {dimension_semantics = [#tpu.dimension_semantics<parallel>], iteration_bounds = array<i64: 1>, scalar_prefetch = 0 : i64, scratch_operands = 0 : i64, tpu.core_type = #tpu.core_type<tc>, window_params = [{transform_indices = @transform_0, window_bounds = array<i64: 2, 8, 32>}, {transform_indices = @transform_1, window_bounds = array<i64: 2, 8, 32>}, {transform_indices = @transform_2, window_bounds = array<i64: 2, 8, 32>}, {transform_indices = @transform_3, window_bounds = array<i64: 2, 8>}, {pipeline_mode = #tpu.pipeline_mode<synchronous>, transform_indices = @transform_4, window_bounds = array<i64: 32, 32>}, {pipeline_mode = #tpu.pipeline_mode<synchronous>, transform_indices = @transform_5, window_bounds = array<i64: 32, 16>}, {pipeline_mode = #tpu.pipeline_mode<synchronous>, transform_indices = @transform_6, window_bounds = array<i64: 32, 32>}, {pipeline_mode = #tpu.pipeline_mode<synchronous>, transform_indices = @transform_7, window_bounds = array<i64: 1, 32>}, {pipeline_mode = #tpu.pipeline_mode<synchronous>, transform_indices = @transform_8, window_bounds = array<i64: 32, 16>}, {pipeline_mode = #tpu.pipeline_mode<synchronous>, transform_indices = @transform_9, window_bounds = array<i64: 1, 16>}, {transform_indices = @transform_10, window_bounds = array<i64: 2, 128>}]} {
    %c0 = arith.constant 0 : index
    %c0_0 = arith.constant 0 : index
    %c0_1 = arith.constant 0 : index
    %0 = vector.load %arg1[%c0, %c0_0, %c0_1] : memref<2x8x32xbf16, #tpu.memory_space<vmem>>, vector<2x8x32xbf16>
    %c0_2 = arith.constant 0 : index
    %c0_3 = arith.constant 0 : index
    %c0_4 = arith.constant 0 : index
    %1 = vector.load %arg2[%c0_2, %c0_3, %c0_4] : memref<2x8x32xbf16, #tpu.memory_space<vmem>>, vector<2x8x32xbf16>
    %c0_5 = arith.constant 0 : index
    %c0_6 = arith.constant 0 : index
    %c0_7 = arith.constant 0 : index
    %2 = vector.load %arg3[%c0_5, %c0_6, %c0_7] : memref<2x8x32xbf16, #tpu.memory_space<vmem>>, vector<2x8x32xbf16>
    %3 = arith.extf %2 : vector<2x8x32xbf16> to vector<2x8x32xf32>
    %c0_8 = arith.constant 0 : index
    %c0_9 = arith.constant 0 : index
    %4 = vector.load %arg4[%c0_8, %c0_9] : memref<2x8xf32, #tpu.memory_space<vmem>>, vector<2x8xf32>
    %5 = vector.shape_cast %1 : vector<2x8x32xbf16> to vector<16x32xbf16>
    %c0_10 = arith.constant 0 : index
    %c0_11 = arith.constant 0 : index
    %6 = vector.load %arg6[%c0_10, %c0_11] : memref<32x16xbf16, #tpu.memory_space<vmem>>, vector<32x16xbf16>
    %cst = arith.constant dense<0.000000e+00> : vector<16x16xf32>
    %7 = tpu.matmul %5, %6, %cst {dimension_numbers = #tpu.dot_dimension_numbers<[1], [0], [0], [1], [0, 0, 1, 1], [], []>} : vector<16x32xbf16>, vector<32x16xbf16>, vector<16x16xf32> -> vector<16x16xf32>
    %8 = vector.extract_strided_slice %7 {offsets = [0, 0], sizes = [16, 8], strides = [1, 1]} : vector<16x16xf32> to vector<16x8xf32>
    %9 = vector.shape_cast %8 : vector<16x8xf32> to vector<2x8x8xf32>
    %10 = vector.extract_strided_slice %7 {offsets = [0, 8], sizes = [16, 8], strides = [1, 1]} : vector<16x16xf32> to vector<16x8xf32>
    %11 = vector.shape_cast %10 : vector<16x8xf32> to vector<2x8x8xf32>
    %12 = arith.extf %0 : vector<2x8x32xbf16> to vector<2x8x32xf32>
    %13 = arith.mulf %3, %12 : vector<2x8x32xf32>
    %cst_12 = arith.constant dense<0.000000e+00> : vector<2x32xf32>
    %14 = vector.multi_reduction <add>, %13, %cst_12 [1] : vector<2x8x32xf32> to vector<2x32xf32>
    %cst_13 = arith.constant dense<0.000000e+00> : vector<2x32xf32>
    %15 = vector.multi_reduction <add>, %3, %cst_13 [1] : vector<2x8x32xf32> to vector<2x32xf32>
    %cst_14 = arith.constant 1.000000e-10 : f32
    %16 = vector.broadcast %cst_14 : f32 to vector<2x32xf32>
    %17 = arith.addf %15, %16 : vector<2x32xf32>
    %18 = tpu.reciprocal %17 {approx = true} : vector<2x32xf32> -> vector<2x32xf32>
    %19 = arith.mulf %14, %18 : vector<2x32xf32>
    %20 = arith.truncf %19 : vector<2x32xf32> to vector<2x32xbf16>
    %c0_15 = arith.constant 0 : index
    %c0_16 = arith.constant 0 : index
    %21 = vector.load %arg5[%c0_15, %c0_16] : memref<32x32xbf16, #tpu.memory_space<vmem>>, vector<32x32xbf16>
    %cst_17 = arith.constant dense<0.000000e+00> : vector<2x32xf32>
    %22 = tpu.matmul %20, %21, %cst_17 {dimension_numbers = #tpu.dot_dimension_numbers<[1], [0], [0], [1], [0, 0, 1, 1], [], []>} : vector<2x32xbf16>, vector<32x32xbf16>, vector<2x32xf32> -> vector<2x32xf32>
    %cst_18 = arith.constant 0.353553385 : f32
    %23 = vector.broadcast %cst_18 : f32 to vector<2x32xf32>
    %24 = arith.mulf %22, %23 : vector<2x32xf32>
    %25 = vector.extract_strided_slice %24 {offsets = [0, 0], sizes = [2, 8], strides = [1, 1]} : vector<2x32xf32> to vector<2x8xf32>
    %26 = vector.extract_strided_slice %24 {offsets = [0, 8], sizes = [2, 8], strides = [1, 1]} : vector<2x32xf32> to vector<2x8xf32>
    %27 = vector.extract_strided_slice %24 {offsets = [0, 16], sizes = [2, 8], strides = [1, 1]} : vector<2x32xf32> to vector<2x8xf32>
    %28 = vector.extract_strided_slice %24 {offsets = [0, 24], sizes = [2, 8], strides = [1, 1]} : vector<2x32xf32> to vector<2x8xf32>
    %29 = vector.shape_cast %25 : vector<2x8xf32> to vector<2x1x8xf32>
    %30 = vector.shape_cast %26 : vector<2x8xf32> to vector<2x1x8xf32>
    %31 = vector.shape_cast %27 : vector<2x8xf32> to vector<2x1x8xf32>
    %32 = vector.shape_cast %28 : vector<2x8xf32> to vector<2x1x8xf32>
    %33 = tpu.concatenate %29, %30, %31, %32 in 1 : vector<2x1x8xf32>, vector<2x1x8xf32>, vector<2x1x8xf32>, vector<2x1x8xf32> -> vector<2x4x8xf32>
    %cst_19 = arith.constant 1.000000e+00 : f32
    %34 = vector.broadcast %cst_19 : f32 to vector<2x8xf32>
    %35 = arith.subf %4, %34 : vector<2x8xf32>
    %cst_20 = arith.constant 1.000000e+09 : f32
    %36 = vector.broadcast %cst_20 : f32 to vector<2x8xf32>
    %37 = arith.mulf %36, %35 : vector<2x8xf32>
    "tpu.trace_start"() <{level = 10 : i32, message = "bhc,bkc->bhk"}> : () -> ()
    %cst_21 = arith.constant dense<0.000000e+00> : vector<2x4x8xf32>
    %38 = tpu.matmul %33, %9, %cst_21 {dimension_numbers = #tpu.dot_dimension_numbers<[2], [2], [1], [1], [0, 0, 0, 1, 1, 1], [0], [0]>} : vector<2x4x8xf32>, vector<2x8x8xf32>, vector<2x4x8xf32> -> vector<2x4x8xf32>
    "tpu.trace_stop"() : () -> ()
    %39 = vector.shape_cast %37 : vector<2x8xf32> to vector<2x1x8xf32>
    %40 = vector.broadcast %39 : vector<2x1x8xf32> to vector<2x4x8xf32>
    %41 = arith.addf %38, %40 : vector<2x4x8xf32>
    %cst_22 = arith.constant dense<0xFF800000> : vector<2x4xf32>
    %42 = vector.multi_reduction <maximumf>, %41, %cst_22 [2] : vector<2x4x8xf32> to vector<2x4xf32>
    %43 = vector.shape_cast %42 : vector<2x4xf32> to vector<2x4x1xf32>
    %44 = vector.broadcast %43 : vector<2x4x1xf32> to vector<2x4x8xf32>
    %45 = arith.subf %41, %44 : vector<2x4x8xf32>
    %46 = math.exp %45 : vector<2x4x8xf32>
    %cst_23 = arith.constant dense<0.000000e+00> : vector<2x4xf32>
    %47 = vector.multi_reduction <add>, %46, %cst_23 [2] : vector<2x4x8xf32> to vector<2x4xf32>
    %48 = vector.shape_cast %47 : vector<2x4xf32> to vector<2x4x1xf32>
    %49 = tpu.reciprocal %48 {approx = true} : vector<2x4x1xf32> -> vector<2x4x1xf32>
    %50 = vector.broadcast %49 : vector<2x4x1xf32> to vector<2x4x8xf32>
    %51 = arith.mulf %46, %50 : vector<2x4x8xf32>
    "tpu.trace_start"() <{level = 10 : i32, message = "bhk,bkc->bhc"}> : () -> ()
    %cst_24 = arith.constant dense<0.000000e+00> : vector<2x4x8xf32>
    %52 = tpu.matmul %51, %11, %cst_24 {dimension_numbers = #tpu.dot_dimension_numbers<[2], [1], [1], [2], [0, 0, 0, 1, 1, 2], [0], [0]>} : vector<2x4x8xf32>, vector<2x8x8xf32>, vector<2x4x8xf32> -> vector<2x4x8xf32>
    "tpu.trace_stop"() : () -> ()
    %53 = vector.extract_strided_slice %52 {offsets = [0, 0, 0], sizes = [2, 1, 8], strides = [1, 1, 1]} : vector<2x4x8xf32> to vector<2x1x8xf32>
    %54 = vector.shape_cast %53 : vector<2x1x8xf32> to vector<2x8xf32>
    %55 = vector.extract_strided_slice %52 {offsets = [0, 1, 0], sizes = [2, 1, 8], strides = [1, 1, 1]} : vector<2x4x8xf32> to vector<2x1x8xf32>
    %56 = vector.shape_cast %55 : vector<2x1x8xf32> to vector<2x8xf32>
    %57 = vector.extract_strided_slice %52 {offsets = [0, 2, 0], sizes = [2, 1, 8], strides = [1, 1, 1]} : vector<2x4x8xf32> to vector<2x1x8xf32>
    %58 = vector.shape_cast %57 : vector<2x1x8xf32> to vector<2x8xf32>
    %59 = vector.extract_strided_slice %52 {offsets = [0, 3, 0], sizes = [2, 1, 8], strides = [1, 1, 1]} : vector<2x4x8xf32> to vector<2x1x8xf32>
    %60 = vector.shape_cast %59 : vector<2x1x8xf32> to vector<2x8xf32>
    %61 = tpu.concatenate %54, %56, %58, %60 in 1 : vector<2x8xf32>, vector<2x8xf32>, vector<2x8xf32>, vector<2x8xf32> -> vector<2x32xf32>
    %62 = vector.shape_cast %0 : vector<2x8x32xbf16> to vector<16x32xbf16>
    %c0_25 = arith.constant 0 : index
    %c0_26 = arith.constant 0 : index
    %63 = vector.load %arg7[%c0_25, %c0_26] : memref<32x32xbf16, #tpu.memory_space<vmem>>, vector<32x32xbf16>
    %cst_27 = arith.constant dense<0.000000e+00> : vector<16x32xf32>
    %64 = tpu.matmul %62, %63, %cst_27 {dimension_numbers = #tpu.dot_dimension_numbers<[1], [0], [0], [1], [0, 0, 1, 1], [], []>} : vector<16x32xbf16>, vector<32x32xbf16>, vector<16x32xf32> -> vector<16x32xf32>
    %c0_28 = arith.constant 0 : index
    %c0_29 = arith.constant 0 : index
    %65 = vector.load %arg8[%c0_28, %c0_29] : memref<1x32xf32, #tpu.memory_space<vmem>>, vector<1x32xf32>
    %66 = vector.broadcast %65 : vector<1x32xf32> to vector<16x32xf32>
    %67 = arith.addf %64, %66 : vector<16x32xf32>
    %68 = arith.negf %67 : vector<16x32xf32>
    %69 = math.exp %68 : vector<16x32xf32>
    %cst_30 = arith.constant 1.000000e+00 : f32
    %70 = vector.broadcast %cst_30 : f32 to vector<16x32xf32>
    %71 = arith.addf %70, %69 : vector<16x32xf32>
    %72 = arith.divf %70, %71 : vector<16x32xf32>
    %73 = vector.shape_cast %72 : vector<16x32xf32> to vector<2x8x32xf32>
    %74 = vector.shape_cast %61 : vector<2x32xf32> to vector<2x1x32xf32>
    %75 = vector.broadcast %74 : vector<2x1x32xf32> to vector<2x8x32xf32>
    %76 = arith.mulf %73, %75 : vector<2x8x32xf32>
    %77 = vector.shape_cast %76 : vector<2x8x32xf32> to vector<16x32xf32>
    %78 = arith.truncf %77 : vector<16x32xf32> to vector<16x32xbf16>
    %c0_31 = arith.constant 0 : index
    %c0_32 = arith.constant 0 : index
    %79 = vector.load %arg9[%c0_31, %c0_32] : memref<32x16xbf16, #tpu.memory_space<vmem>>, vector<32x16xbf16>
    %cst_33 = arith.constant dense<0.000000e+00> : vector<16x16xf32>
    %80 = tpu.matmul %78, %79, %cst_33 {dimension_numbers = #tpu.dot_dimension_numbers<[1], [0], [0], [1], [0, 0, 1, 1], [], []>} : vector<16x32xbf16>, vector<32x16xbf16>, vector<16x16xf32> -> vector<16x16xf32>
    %c0_34 = arith.constant 0 : index
    %c0_35 = arith.constant 0 : index
    %81 = vector.load %arg10[%c0_34, %c0_35] : memref<1x16xf32, #tpu.memory_space<vmem>>, vector<1x16xf32>
    %82 = vector.broadcast %81 : vector<1x16xf32> to vector<16x16xf32>
    %83 = arith.addf %80, %82 : vector<16x16xf32>
    %84 = vector.shape_cast %83 : vector<16x16xf32> to vector<2x8x16xf32>
    %85 = vector.extract_strided_slice %84 {offsets = [0, 0, 0], sizes = [2, 1, 16], strides = [1, 1, 1]} : vector<2x8x16xf32> to vector<2x1x16xf32>
    %86 = vector.shape_cast %85 : vector<2x1x16xf32> to vector<2x16xf32>
    %87 = vector.extract_strided_slice %84 {offsets = [0, 1, 0], sizes = [2, 1, 16], strides = [1, 1, 1]} : vector<2x8x16xf32> to vector<2x1x16xf32>
    %88 = vector.shape_cast %87 : vector<2x1x16xf32> to vector<2x16xf32>
    %89 = vector.extract_strided_slice %84 {offsets = [0, 2, 0], sizes = [2, 1, 16], strides = [1, 1, 1]} : vector<2x8x16xf32> to vector<2x1x16xf32>
    %90 = vector.shape_cast %89 : vector<2x1x16xf32> to vector<2x16xf32>
    %91 = vector.extract_strided_slice %84 {offsets = [0, 3, 0], sizes = [2, 1, 16], strides = [1, 1, 1]} : vector<2x8x16xf32> to vector<2x1x16xf32>
    %92 = vector.shape_cast %91 : vector<2x1x16xf32> to vector<2x16xf32>
    %93 = vector.extract_strided_slice %84 {offsets = [0, 4, 0], sizes = [2, 1, 16], strides = [1, 1, 1]} : vector<2x8x16xf32> to vector<2x1x16xf32>
    %94 = vector.shape_cast %93 : vector<2x1x16xf32> to vector<2x16xf32>
    %95 = vector.extract_strided_slice %84 {offsets = [0, 5, 0], sizes = [2, 1, 16], strides = [1, 1, 1]} : vector<2x8x16xf32> to vector<2x1x16xf32>
    %96 = vector.shape_cast %95 : vector<2x1x16xf32> to vector<2x16xf32>
    %97 = vector.extract_strided_slice %84 {offsets = [0, 6, 0], sizes = [2, 1, 16], strides = [1, 1, 1]} : vector<2x8x16xf32> to vector<2x1x16xf32>
    %98 = vector.shape_cast %97 : vector<2x1x16xf32> to vector<2x16xf32>
    %99 = vector.extract_strided_slice %84 {offsets = [0, 7, 0], sizes = [2, 1, 16], strides = [1, 1, 1]} : vector<2x8x16xf32> to vector<2x1x16xf32>
    %100 = vector.shape_cast %99 : vector<2x1x16xf32> to vector<2x16xf32>
    %101 = tpu.concatenate %86, %88, %90, %92, %94, %96, %98, %100 in 1 : vector<2x16xf32>, vector<2x16xf32>, vector<2x16xf32>, vector<2x16xf32>, vector<2x16xf32>, vector<2x16xf32>, vector<2x16xf32>, vector<2x16xf32> -> vector<2x128xf32>
    %c0_36 = arith.constant 0 : index
    %c0_37 = arith.constant 0 : index
    %102 = vector.load %arg11[%c0_36, %c0_37] : memref<2x128xf32, #tpu.memory_space<vmem>>, vector<2x128xf32>
    tpu.vector_store %arg11[%c0_36, %c0_37], %101 {strides = array<i32>} : memref<2x128xf32, #tpu.memory_space<vmem>>, vector<2x128xf32>,
    return
  }
  func.func @transform_0(%arg0: i32) -> (i32, i32, i32) {
    %c0_i32 = arith.constant 0 : i32
    %c0_i32_0 = arith.constant 0 : i32
    %c0_i32_1 = arith.constant 0 : i32
    return %arg0, %c0_i32, %c0_i32_0 : i32, i32, i32
  }
  func.func @transform_1(%arg0: i32) -> (i32, i32, i32) {
    %c0_i32 = arith.constant 0 : i32
    %c0_i32_0 = arith.constant 0 : i32
    %c0_i32_1 = arith.constant 0 : i32
    return %arg0, %c0_i32, %c0_i32_0 : i32, i32, i32
  }
  func.func @transform_2(%arg0: i32) -> (i32, i32, i32) {
    %c0_i32 = arith.constant 0 : i32
    %c0_i32_0 = arith.constant 0 : i32
    %c0_i32_1 = arith.constant 0 : i32
    return %arg0, %c0_i32, %c0_i32_0 : i32, i32, i32
  }
  func.func @transform_3(%arg0: i32) -> (i32, i32) {
    %c0_i32 = arith.constant 0 : i32
    %c0_i32_0 = arith.constant 0 : i32
    return %arg0, %c0_i32 : i32, i32
  }
  func.func @transform_4(%arg0: i32) -> (i32, i32) {
    %c0_i32 = arith.constant 0 : i32
    %c0_i32_0 = arith.constant 0 : i32
    %c0_i32_1 = arith.constant 0 : i32
    return %c0_i32, %c0_i32_0 : i32, i32
  }
  func.func @transform_5(%arg0: i32) -> (i32, i32) {
    %c0_i32 = arith.constant 0 : i32
    %c0_i32_0 = arith.constant 0 : i32
    %c0_i32_1 = arith.constant 0 : i32
    return %c0_i32, %c0_i32_0 : i32, i32
  }
  func.func @transform_6(%arg0: i32) -> (i32, i32) {
    %c0_i32 = arith.constant 0 : i32
    %c0_i32_0 = arith.constant 0 : i32
    %c0_i32_1 = arith.constant 0 : i32
    return %c0_i32, %c0_i32_0 : i32, i32
  }
  func.func @transform_7(%arg0: i32) -> (i32, i32) {
    %c0_i32 = arith.constant 0 : i32
    %c0_i32_0 = arith.constant 0 : i32
    %c0_i32_1 = arith.constant 0 : i32
    return %c0_i32, %c0_i32_0 : i32, i32
  }
  func.func @transform_8(%arg0: i32) -> (i32, i32) {
    %c0_i32 = arith.constant 0 : i32
    %c0_i32_0 = arith.constant 0 : i32
    %c0_i32_1 = arith.constant 0 : i32
    return %c0_i32, %c0_i32_0 : i32, i32
  }
  func.func @transform_9(%arg0: i32) -> (i32, i32) {
    %c0_i32 = arith.constant 0 : i32
    %c0_i32_0 = arith.constant 0 : i32
    %c0_i32_1 = arith.constant 0 : i32
    return %c0_i32, %c0_i32_0 : i32, i32
  }
  func.func @transform_10(%arg0: i32) -> (i32, i32) {
    %c0_i32 = arith.constant 0 : i32
    %c0_i32_0 = arith.constant 0 : i32
    return %arg0, %c0_i32 : i32, i32
  }
}

</mosaic_0001>

<llo_original>
// kernel: tpu_custom_call.1
$region0: #{tpu_custom_call.1}
  #allocation0 [shape = 'u32[]', space=smem, size = 0x4, offset = 0x4, fixed_abs, tag = 'smem constant byte address 0x4 - core index']
  #allocation1 [shape = 'u32[72,128]{1,0:T(1,128)}', space=vmem, size = 0x9000, scoped, tag = 'internal scratch']
  %s0 = inlined_call_operand.vmem [shape: bf16[2,8,32], index: 0, kind: input, shape index: {}]
  %s1 = inlined_call_operand.hbm [shape: bf16[2,8,32], index: 1, kind: input, shape index: {}]
  %s2 = inlined_call_operand.hbm [shape: bf16[2,8,32], index: 2, kind: input, shape index: {}]
  %s3 = inlined_call_operand.vmem [shape: f32[2,8], index: 3, kind: input, shape index: {}]
  %s4 = inlined_call_operand.vmem [shape: bf16[32,32], index: 4, kind: input, shape index: {}]
  %s5 = inlined_call_operand.vmem [shape: bf16[32,16], index: 5, kind: input, shape index: {}]
  %s6 = inlined_call_operand.vmem [shape: bf16[32,32], index: 6, kind: input, shape index: {}]
  %s7 = inlined_call_operand.vmem [shape: f32[1,32], index: 7, kind: input, shape index: {}]
  %s8 = inlined_call_operand.vmem [shape: bf16[32,16], index: 8, kind: input, shape index: {}]
  %s9 = inlined_call_operand.vmem [shape: f32[1,16], index: 9, kind: input, shape index: {}]
  %s10 = inlined_call_operand.hbm [shape: f32[2,128], index: 10, kind: output, shape index: {}]
  %s11 = sld [smem:[#allocation0]]
  $region58: #{tpu_custom_call.1} parent=0
    _
  %s13 = ssub.s32 1, %s11
  %s14 = scalar_select 0, %s13, %s11
  $region1: #{tpu_custom_call.1} parent=0
    #allocation2 [shape = 'u8[4096]{0}', space=vmem, size = 0x1000, scoped, tag = 'input window, operand 1, single buffered']
    #allocation3 [shape = 's32[1]{0}', space=sflag, size = 0x4, scoped, tag = 'scoped memory for tpu_custom_call.1']
    #allocation4 [shape = 's32[1]{0}', space=sflag, size = 0x4, scoped, tag = 'scoped memory for tpu_custom_call.1']
    #allocation5 [shape = 'u8[4096]{0}', space=vmem, size = 0x1000, scoped, tag = 'input window, operand 2, single buffered']
    #allocation6 [shape = 's32[1]{0}', space=sflag, size = 0x4, scoped, tag = 'scoped memory for tpu_custom_call.1']
    #allocation7 [shape = 'u8[1024]{0}', space=vmem, size = 0x400, scoped, tag = 'output window, operand 0, single buffered']
    %15 = vsyncpa [#allocation3], 0
    %16 = vsyncpa [#allocation6], 0
    %17 = vsyncpa [#allocation4], 0
    // Predicated region
    $region2: #{tpu_custom_call.1} parent=1 // pred_check
      _
    $region3: #{tpu_custom_call.1} parent=1 // pred_check_branch
      %19 = sbr.rel (0) target = $region5
    $region4: #{tpu_custom_call.1} parent=1 // pred_region
      _
    $region5: #{tpu_custom_call.1} parent=1 // pred_fallthru
      _
    // Predicated region
    $region6: #{tpu_custom_call.1} parent=1 // pred_check
      _
    $region7: #{tpu_custom_call.1} parent=1 // pred_check_branch
      %21 = sbr.rel (0) target = $region9
    $region8: #{tpu_custom_call.1} parent=1 // pred_region
      %23 = vsyncadd [#allocation3], 0
      %s24 = sshll.u32 %s1, 4
      %s25 = int_to_ptr.hbm [resolvable:$true] %s24
      %s26 = sshll.u32 [#allocation2], 4
      %s27 = int_to_ptr.vmem [resolvable:$true] %s26
      %32 = dma.hbm_to_vmem [thread:$0]  %s25, 128, %s27, [#allocation3], 64, 64, 4
    $region9: #{tpu_custom_call.1} parent=1 // pred_fallthru
      _
    // Predicated region
    $region10: #{tpu_custom_call.1} parent=1 // pred_check
      _
    $region11: #{tpu_custom_call.1} parent=1 // pred_check_branch
      %34 = sbr.rel (0) target = $region13
    $region12: #{tpu_custom_call.1} parent=1 // pred_region
      %36 = vsyncadd [#allocation6], 0
      %s37 = sshll.u32 %s2, 4
      %s38 = int_to_ptr.hbm [resolvable:$true] %s37
      %s39 = sshll.u32 [#allocation5], 4
      %s40 = int_to_ptr.vmem [resolvable:$true] %s39
      %45 = dma.hbm_to_vmem [thread:$0]  %s38, 128, %s40, [#allocation6], 64, 64, 4
    $region13: #{tpu_custom_call.1} parent=1 // pred_fallthru
      _
    // Predicated region
    $region14: #{tpu_custom_call.1} parent=1 // pred_check
      _
    $region15: #{tpu_custom_call.1} parent=1 // pred_check_branch
      %47 = sbr.rel (0) target = $region17
    $region16: #{tpu_custom_call.1} parent=1 // pred_region
      _
    $region17: #{tpu_custom_call.1} parent=1 // pred_fallthru
      _
    // Predicated region
    $region18: #{tpu_custom_call.1} parent=1 // pred_check
      _
    $region19: #{tpu_custom_call.1} parent=1 // pred_check_branch
      %49 = sbr.rel (0) target = $region21
    $region20: #{tpu_custom_call.1} parent=1 // pred_region
      _
    $region21: #{tpu_custom_call.1} parent=1 // pred_fallthru
      _
    // Predicated region
    $region22: #{tpu_custom_call.1} parent=1 // pred_check
      _
    $region23: #{tpu_custom_call.1} parent=1 // pred_check_branch
      %51 = sbr.rel (0) target = $region25
    $region24: #{tpu_custom_call.1} parent=1 // pred_region
      _
    $region25: #{tpu_custom_call.1} parent=1 // pred_fallthru
      _
    // Predicated region
    $region26: #{tpu_custom_call.1} parent=1 // pred_check
      _
    $region27: #{tpu_custom_call.1} parent=1 // pred_check_branch
      %53 = sbr.rel (0) target = $region29
    $region28: #{tpu_custom_call.1} parent=1 // pred_region
      _
    $region29: #{tpu_custom_call.1} parent=1 // pred_fallthru
      _
    // Predicated region
    $region30: #{tpu_custom_call.1} parent=1 // pred_check
      _
    $region31: #{tpu_custom_call.1} parent=1 // pred_check_branch
      %55 = sbr.rel (0) target = $region33
    $region32: #{tpu_custom_call.1} parent=1 // pred_region
      _
    $region33: #{tpu_custom_call.1} parent=1 // pred_fallthru
      _
    // Predicated region
    $region34: #{tpu_custom_call.1} parent=1 // pred_check
      _
    $region35: #{tpu_custom_call.1} parent=1 // pred_check_branch
      %57 = sbr.rel (0) target = $region37
    $region36: #{tpu_custom_call.1} parent=1 // pred_region
      _
    $region37: #{tpu_custom_call.1} parent=1 // pred_fallthru
      _
    // Predicated region
    $region38: #{tpu_custom_call.1} parent=1 // pred_check
      _
    $region39: #{tpu_custom_call.1} parent=1 // pred_check_branch
      %59 = sbr.rel (0) target = $region41
    $region40: #{tpu_custom_call.1} parent=1 // pred_region
      _
    $region41: #{tpu_custom_call.1} parent=1 // pred_fallthru
      _
    // Predicated region
    $region42: #{tpu_custom_call.1} parent=1 // pred_check
      _
    $region43: #{tpu_custom_call.1} parent=1 // pred_check_branch
      %61 = sbr.rel (0) target = $region45
    $region44: #{tpu_custom_call.1} parent=1 // pred_region
      %63 = dma.done [#allocation3], 128
    $region45: #{tpu_custom_call.1} parent=1 // pred_fallthru
      _
    // Predicated region
    $region46: #{tpu_custom_call.1} parent=1 // pred_check
      _
    $region47: #{tpu_custom_call.1} parent=1 // pred_check_branch
      %65 = sbr.rel (0) target = $region49
    $region48: #{tpu_custom_call.1} parent=1 // pred_region
      %67 = dma.done [#allocation6], 128
    $region49: #{tpu_custom_call.1} parent=1 // pred_fallthru
      _
    %v69 = vld [vmem:[%s0] sm:$0xf]
    %v70 = vld [vmem:[%s0 + $0x4] sm:$0xf]
    %v71 = vld [vmem:[#allocation2] sm:$0xf]
    %v72 = vld [vmem:[#allocation2 + $0x4] sm:$0xf]
    %v73 = vld [vmem:[#allocation5] sm:$0xf]
    %v74 = vld [vmem:[#allocation5 + $0x4] sm:$0xf]
    %v75 = vunpack.c.l.bf16 %v73
    %v76 = vunpack.c.l.bf16 %v74
    %v77 = vld [vmem:[%s3] sm:$0x3]
    %v78 = vld [vmem:[%s5] sm:$0xf]
    %v79 = vld [vmem:[%s5 + $0x4] sm:$0xf]
    %v80 = vld [vmem:[%s5 + $0x8] sm:$0xf]
    %v81 = vld [vmem:[%s5 + $0xc] sm:$0xf]
    %v84 = vunpack.c.l.b16 %v71
    %v85 = vunpack.c.l.b16 %v72
    %v86 = vpack.c.b16 %v85, %v84
    %v91 = vunpack.c.l.b16 %v78
    %v92 = vunpack.c.l.b16 %v79
    %v93 = vunpack.c.l.b16 %v80
    %v94 = vunpack.c.l.b16 %v81
    %v95 = vpack.c.b16 %v92, %v91
    %v96 = vpack.c.b16 %v94, %v93
    %vm99 = vcmask 261120
    %v101 = vsel %vm99, %v86, 0
    %103 = vmatpush.bf16.msra.mxu0 0
    %104 = vmatpush.bf16.msra.mxu0 0
    %105 = vmatpush.bf16.msra.mxu0 0
    %106 = vmatpush.bf16.msra.mxu0 0
    %107 = vmatpush.bf16.msra.mxu0 0
    %108 = vmatpush.bf16.msra.mxu0 0
    %109 = vmatpush.bf16.msra.mxu0 %v96
    %110 = vmatpush.bf16.msra.mxu0 %v95
    %111 = vmatmul.bf16.gmra.mxu0 %v101
    %v112 = vpop.f32.mrf.mxu0
    %v113 = vadd.f32 0.0, %v112
    %v114 = vpop.f32.mrf.mxu0
    %v115 = vadd.f32 0.0, %v114
    %116 = vdwg.mxu0
    %v117 = vunpack.c.l.bf16 %v69
    %v118 = vunpack.c.l.bf16 %v70
    %v119 = vmul.f32 %v75, %v117
    %v120 = vmul.f32 %v76, %v118
    %v121 = vsel %vm99, %v119, 0.0
    %v122 = vrot.slane %v121, 4
    %v123 = vadd.f32 %v121, %v122
    %v124 = vrot.slane %v123, 2
    %v125 = vadd.f32 %v123, %v124
    %v126 = vrot.slane %v125, 1
    %v127 = vadd.f32 %v125, %v126
    %v128 = vsel %vm99, %v120, 0.0
    %v129 = vrot.slane %v128, 4
    %v130 = vadd.f32 %v128, %v129
    %v131 = vrot.slane %v130, 2
    %v132 = vadd.f32 %v130, %v131
    %v133 = vrot.slane %v132, 1
    %v134 = vadd.f32 %v132, %v133
    %v135 = vsel %vm99, %v75, 0.0
    %v136 = vrot.slane %v135, 4
    %v137 = vadd.f32 %v135, %v136
    %v138 = vrot.slane %v137, 2
    %v139 = vadd.f32 %v137, %v138
    %v140 = vrot.slane %v139, 1
    %v141 = vadd.f32 %v139, %v140
    %v142 = vsel %vm99, %v76, 0.0
    %v143 = vrot.slane %v142, 4
    %v144 = vadd.f32 %v142, %v143
    %v145 = vrot.slane %v144, 2
    %v146 = vadd.f32 %v144, %v145
    %v147 = vrot.slane %v146, 1
    %v148 = vadd.f32 %v146, %v147
    %v149 = vadd.f32 %v141, 1e-10
    %v150 = vadd.f32 %v148, 1e-10
    %v151 = vrcp.pop %v149
    %v152 = vrcp.pop %v150
    %v153 = vmul.f32 %v127, %v151
    %v154 = vmul.f32 %v134, %v152
    %v155 = vpack.c.bf16 %v153, %v153
    %v156 = vpack.c.bf16 %v154, %v154
    %v157 = vld [vmem:[%s4] sm:$0xf]
    %v158 = vld [vmem:[%s4 + $0x4] sm:$0xf]
    %v159 = vld [vmem:[%s4 + $0x8] sm:$0xf]
    %v160 = vld [vmem:[%s4 + $0xc] sm:$0xf]
    %v163 = vunpack.c.l.b16 %v155
    %v164 = vunpack.c.l.b16 %v156
    %vm165 = vcmask 1041409
    %v166 = vsel %vm165, %v164, %v163
    %v167 = vpack.c.b16 %v166, %v166
    %v172 = vunpack.c.l.b16 %v157
    %v173 = vunpack.c.l.b16 %v158
    %v174 = vunpack.c.l.b16 %v159
    %v175 = vunpack.c.l.b16 %v160
    %v176 = vpack.c.b16 %v173, %v172
    %v177 = vpack.c.b16 %v175, %v174
    %v181 = vsel %vm99, %v167, 0
    %183 = vmatpush.bf16.msra.mxu0 0
    %184 = vmatpush.bf16.msra.mxu0 0
    %185 = vmatpush.bf16.msra.mxu0 0
    %186 = vmatpush.bf16.msra.mxu0 0
    %187 = vmatpush.bf16.msra.mxu0 0
    %188 = vmatpush.bf16.msra.mxu0 0
    %189 = vmatpush.bf16.msra.mxu0 %v177
    %190 = vmatpush.bf16.msra.mxu0 %v176
    %191 = vmatmul.bf16.gmra.mxu0 %v181
    %v192 = vpop.f32.mrf.mxu0
    %v193 = vadd.f32 0.0, %v192
    %v194 = vpop.f32.mrf.mxu0
    %195 = vdwg.mxu0
    %v196 = vmul.f32 %v193, 0.35355338
    %v198 = vrot.slane %v196, 1
    %v200 = vperm.slane %v196, 0
    %v201 = vperm.slane %v198, 0
    %202 = vrot.lane.b32.xlu0 %v200, 120
    %v203 = vpop.permute.xlu0 %202
    %204 = vrot.lane.b32.xlu0 %v201, 120
    %v205 = vpop.permute.xlu0 %204
    %208 = vrot.lane.b32.xlu0 %v200, 112
    %v209 = vpop.permute.xlu0 %208
    %210 = vrot.lane.b32.xlu0 %v201, 112
    %v211 = vpop.permute.xlu0 %210
    %214 = vrot.lane.b32.xlu0 %v200, 104
    %v215 = vpop.permute.xlu0 %214
    %216 = vrot.lane.b32.xlu0 %v201, 104
    %v217 = vpop.permute.xlu0 %216
    %vm220 = vcmask 1040384
    %v221 = vsel %vm220, %v196, %v203
    %v222 = vsel %vm220, %v198, %v205
    %vm223 = vcmask 1041408
    %v224 = vsel %vm223, %v221, %v209
    %v225 = vsel %vm223, %v222, %v211
    %vm226 = vcmask 1042432
    %v227 = vsel %vm226, %v224, %v215
    %v228 = vsel %vm226, %v225, %v217
    %v229 = vsub.f32 %v77, 1.0
    %v230 = vmul.f32 %v229, 1e+09
    %v232 = vrot.slane %v230, 1
    %v233 = vperm.slane %v230, 0
    %v234 = vperm.slane %v232, 0
    %vm237 = vcmask 64512
    %v239 = vsel %vm237, %v227, 0
    %v242 = vsel %vm237, %v113, 0
    %244 = vmatpush.xpose.msra.mxu0 0.0
    %245 = vmatpush.xpose.msra.mxu0 0.0
    %246 = vmatpush.xpose.msra.mxu0 0.0
    %247 = vmatpush.xpose.msra.mxu0 0.0
    %248 = vmatpush.xpose.msra.mxu0 0.0
    %249 = vmatpush.xpose.msra.mxu0 0.0
    %250 = vmatpush.xpose.msra.mxu0 0.0
    %251 = vmatpush.xpose.msra.mxu0 0.0
    %252 = vmatpush.xpose.msra.mxu0 0.0
    %253 = vmatpush.xpose.msra.mxu0 0.0
    %254 = vmatpush.xpose.msra.mxu0 0.0
    %255 = vmatpush.xpose.msra.mxu0 0.0
    %256 = vmatpush.xpose.msra.mxu0 0.0
    %257 = vmatpush.xpose.msra.mxu0 0.0
    %258 = vmatpush.xpose.msra.mxu0 0.0
    %259 = vmatpush.xpose.msra.mxu0 %v242
    %260 = vmatmul.f32.gmra.mxu0 %v239
    %v261 = vpop.f32.mrf.mxu0
    %v262 = vadd.f32 %v233, %v261
    %263 = vdwg.mxu0
    %v265 = vsel %vm237, %v228, 0
    %v268 = vsel %vm237, %v115, 0
    %270 = vmatpush.xpose.msra.mxu0 0.0
    %271 = vmatpush.xpose.msra.mxu0 0.0
    %272 = vmatpush.xpose.msra.mxu0 0.0
    %273 = vmatpush.xpose.msra.mxu0 0.0
    %274 = vmatpush.xpose.msra.mxu0 0.0
    %275 = vmatpush.xpose.msra.mxu0 0.0
    %276 = vmatpush.xpose.msra.mxu0 0.0
    %277 = vmatpush.xpose.msra.mxu0 0.0
    %278 = vmatpush.xpose.msra.mxu0 0.0
    %279 = vmatpush.xpose.msra.mxu0 0.0
    %280 = vmatpush.xpose.msra.mxu0 0.0
    %281 = vmatpush.xpose.msra.mxu0 0.0
    %282 = vmatpush.xpose.msra.mxu0 0.0
    %283 = vmatpush.xpose.msra.mxu0 0.0
    %284 = vmatpush.xpose.msra.mxu0 0.0
    %285 = vmatpush.xpose.msra.mxu0 %v268
    %286 = vmatmul.f32.gmra.mxu0 %v265
    %v287 = vpop.f32.mrf.mxu0
    %v288 = vadd.f32 %v234, %v287
    %289 = vdwg.mxu0
    %vm290 = vcmask 60416
    %v291 = vsel %vm290, %v262, -inf
    %292 = vmax.xlane.f32.xlu0 %v291
    %v293 = vpop.xlane.xlu0 %292
    %v294 = vsel %vm290, %v288, -inf
    %295 = vmax.xlane.f32.xlu0 %v294
    %v296 = vpop.xlane.xlu0 %295
    %v297 = vsub.f32 %v262, %v293
    %v298 = vsub.f32 %v288, %v296
    %v299 = vmul.f32 %v297, 1.442695
    %v300 = vpow.pop %v299
    %v301 = vmul.f32 %v298, 1.442695
    %v302 = vpow.pop %v301
    %v303 = vsel %vm290, %v300, 0.0
    %304 = vadd.xlane.f32.xlu0 %v303
    %v305 = vpop.xlane.xlu0 %304
    %v306 = vsel %vm290, %v302, 0.0
    %307 = vadd.xlane.f32.xlu0 %v306
    %v308 = vpop.xlane.xlu0 %307
    %v309 = vrcp.pop %v305
    %v310 = vrcp.pop %v308
    %v311 = vmul.f32 %v300, %v309
    %v312 = vmul.f32 %v302, %v310
    %313 = vrot.lane.b32.xlu0 %v113, 120
    %v314 = vpop.permute.xlu0 %313
    %v317 = vsel %vm237, %v311, 0
    %319 = vmatpush.msra.mxu0 0.0
    %320 = vmatpush.msra.mxu0 0.0
    %321 = vmatpush.msra.mxu0 0.0
    %322 = vmatpush.msra.mxu0 0.0
    %323 = vmatpush.msra.mxu0 0.0
    %324 = vmatpush.msra.mxu0 0.0
    %325 = vmatpush.msra.mxu0 0.0
    %326 = vmatpush.msra.mxu0 0.0
    %327 = vmatpush.msra.mxu0 0.0
    %328 = vmatpush.msra.mxu0 0.0
    %329 = vmatpush.msra.mxu0 0.0
    %330 = vmatpush.msra.mxu0 0.0
    %331 = vmatpush.msra.mxu0 0.0
    %332 = vmatpush.msra.mxu0 0.0
    %333 = vmatpush.msra.mxu0 0.0
    %334 = vmatpush.msra.mxu0 %v314
    %335 = vmatmul.f32.gmra.mxu0 %v317
    %v336 = vpop.f32.mrf.mxu0
    %v337 = vadd.f32 0.0, %v336
    %338 = vdwg.mxu0
    %339 = vrot.lane.b32.xlu0 %v115, 120
    %v340 = vpop.permute.xlu0 %339
    %v343 = vsel %vm237, %v312, 0
    %345 = vmatpush.msra.mxu0 0.0
    %346 = vmatpush.msra.mxu0 0.0
    %347 = vmatpush.msra.mxu0 0.0
    %348 = vmatpush.msra.mxu0 0.0
    %349 = vmatpush.msra.mxu0 0.0
    %350 = vmatpush.msra.mxu0 0.0
    %351 = vmatpush.msra.mxu0 0.0
    %352 = vmatpush.msra.mxu0 0.0
    %353 = vmatpush.msra.mxu0 0.0
    %354 = vmatpush.msra.mxu0 0.0
    %355 = vmatpush.msra.mxu0 0.0
    %356 = vmatpush.msra.mxu0 0.0
    %357 = vmatpush.msra.mxu0 0.0
    %358 = vmatpush.msra.mxu0 0.0
    %359 = vmatpush.msra.mxu0 0.0
    %360 = vmatpush.msra.mxu0 %v340
    %361 = vmatmul.f32.gmra.mxu0 %v343
    %v362 = vpop.f32.mrf.mxu0
    %v363 = vadd.f32 0.0, %v362
    %364 = vdwg.mxu0
    %v367 = vrot.slane %v363, 7
    %v368 = vsel %vm165, %v367, %v337
    %v370 = vrot.slane %v337, 1
    %v371 = vsel %vm165, %v363, %v370
    %372 = vrot.lane.b32.xlu0 %v371, 8
    %v373 = vpop.permute.xlu0 %372
    %v375 = vrot.slane %v337, 2
    %v376 = vrot.slane %v363, 1
    %v377 = vsel %vm165, %v376, %v375
    %378 = vrot.lane.b32.xlu0 %v377, 16
    %v379 = vpop.permute.xlu0 %378
    %v381 = vrot.slane %v337, 3
    %v382 = vrot.slane %v363, 2
    %v383 = vsel %vm165, %v382, %v381
    %384 = vrot.lane.b32.xlu0 %v383, 24
    %v385 = vpop.permute.xlu0 %384
    %v387 = vsel %vm237, %v368, %v373
    %vm388 = vcmask 130048
    %v389 = vsel %vm388, %v387, %v379
    %vm390 = vcmask 195584
    %v391 = vsel %vm390, %v389, %v385
    %v392 = vld [vmem:[%s6] sm:$0xf]
    %v393 = vld [vmem:[%s6 + $0x4] sm:$0xf]
    %v394 = vld [vmem:[%s6 + $0x8] sm:$0xf]
    %v395 = vld [vmem:[%s6 + $0xc] sm:$0xf]
    %v396 = vld [vmem:[%s7] sm:$0x1]
    %v398 = vperm.slane %v396, 0
    %v402 = vunpack.c.l.b16 %v69
    %v403 = vunpack.c.l.b16 %v70
    %v404 = vpack.c.b16 %v403, %v402
    %v409 = vunpack.c.l.b16 %v392
    %v410 = vunpack.c.l.b16 %v393
    %v411 = vunpack.c.l.b16 %v394
    %v412 = vunpack.c.l.b16 %v395
    %v413 = vpack.c.b16 %v410, %v409
    %v414 = vpack.c.b16 %v412, %v411
    %v418 = vsel %vm99, %v404, 0
    %420 = vmatpush.bf16.msra.mxu0 0
    %421 = vmatpush.bf16.msra.mxu0 0
    %422 = vmatpush.bf16.msra.mxu0 0
    %423 = vmatpush.bf16.msra.mxu0 0
    %424 = vmatpush.bf16.msra.mxu0 0
    %425 = vmatpush.bf16.msra.mxu0 0
    %426 = vmatpush.bf16.msra.mxu0 %v414
    %427 = vmatpush.bf16.msra.mxu0 %v413
    %428 = vmatmul.bf16.gmra.mxu0 %v418
    %v429 = vpop.f32.mrf.mxu0
    %v430 = vadd.f32 %v398, %v429
    %v431 = vpop.f32.mrf.mxu0
    %v432 = vadd.f32 %v398, %v431
    %433 = vdwg.mxu0
    %v434 = vxor.u32 %v430, 2147483648
    %v435 = vxor.u32 %v432, 2147483648
    %v436 = vmul.f32 %v434, 1.442695
    %v437 = vpow.pop %v436
    %v438 = vmul.f32 %v435, 1.442695
    %v439 = vpow.pop %v438
    %v440 = vadd.f32 %v437, 1.0
    %v441 = vadd.f32 %v439, 1.0
    %v442 = vrcp.pop %v440
    %v443 = vmul.f32 %v440, %v442
    %v444 = vsub.f32 1.0, %v443
    %v445 = vmul.f32 %v442, %v444
    %v446 = vadd.f32 %v442, %v445
    %vm447 = vweird.f32 %v440
    %vm448 = vweird.f32 %v442
    %vm449 = vmor %vm447, %vm448
    %v450 = vsel %vm449, %v442, %v446
    %v451 = vand.u32 2147483647, %v440
    %vm452 = vcmp.eq.f32.partialorder %v451, 8.507059e+37
    %v453 = vand.u32 %v440, 2147483648
    %v454 = vor.u32 1.1754944e-38, %v453
    %v455 = vsel %vm452, %v454, %v450
    %v456 = vmul.f32 1.0, %v455
    %v457 = vrcp.pop %v441
    %v458 = vmul.f32 %v441, %v457
    %v459 = vsub.f32 1.0, %v458
    %v460 = vmul.f32 %v457, %v459
    %v461 = vadd.f32 %v457, %v460
    %vm462 = vweird.f32 %v441
    %vm463 = vweird.f32 %v457
    %vm464 = vmor %vm462, %vm463
    %v465 = vsel %vm464, %v457, %v461
    %v466 = vand.u32 2147483647, %v441
    %vm467 = vcmp.eq.f32.partialorder %v466, 8.507059e+37
    %v468 = vand.u32 %v441, 2147483648
    %v469 = vor.u32 1.1754944e-38, %v468
    %v470 = vsel %vm467, %v469, %v465
    %v471 = vmul.f32 1.0, %v470
    %v473 = vrot.slane %v391, 1
    %v474 = vperm.slane %v391, 0
    %v475 = vperm.slane %v473, 0
    %v478 = vmul.f32 %v456, %v474
    %v479 = vmul.f32 %v471, %v475
    %v480 = vpack.c.bf16 %v479, %v478
    %v481 = vld [vmem:[%s8] sm:$0xf]
    %v482 = vld [vmem:[%s8 + $0x4] sm:$0xf]
    %v483 = vld [vmem:[%s8 + $0x8] sm:$0xf]
    %v484 = vld [vmem:[%s8 + $0xc] sm:$0xf]
    %v485 = vld [vmem:[%s9] sm:$0x1]
    %v487 = vperm.slane %v485, 0
    %v493 = vunpack.c.l.b16 %v481
    %v494 = vunpack.c.l.b16 %v482
    %v495 = vunpack.c.l.b16 %v483
    %v496 = vunpack.c.l.b16 %v484
    %v497 = vpack.c.b16 %v494, %v493
    %v498 = vpack.c.b16 %v496, %v495
    %v502 = vsel %vm99, %v480, 0
    %504 = vmatpush.bf16.msra.mxu0 0
    %505 = vmatpush.bf16.msra.mxu0 0
    %506 = vmatpush.bf16.msra.mxu0 0
    %507 = vmatpush.bf16.msra.mxu0 0
    %508 = vmatpush.bf16.msra.mxu0 0
    %509 = vmatpush.bf16.msra.mxu0 0
    %510 = vmatpush.bf16.msra.mxu0 %v498
    %511 = vmatpush.bf16.msra.mxu0 %v497
    %512 = vmatmul.bf16.gmra.mxu0 %v502
    %v513 = vpop.f32.mrf.mxu0
    %v514 = vadd.f32 %v487, %v513
    %v515 = vpop.f32.mrf.mxu0
    %v516 = vadd.f32 %v487, %v515
    %517 = vdwg.mxu0
    %v520 = vrot.slane %v516, 7
    %v521 = vsel %vm165, %v520, %v514
    %v523 = vrot.slane %v514, 1
    %v524 = vsel %vm165, %v516, %v523
    %525 = vrot.lane.b32.xlu0 %v524, 16
    %v526 = vpop.permute.xlu0 %525
    %v528 = vrot.slane %v514, 2
    %v529 = vrot.slane %v516, 1
    %v530 = vsel %vm165, %v529, %v528
    %531 = vrot.lane.b32.xlu0 %v530, 32
    %v532 = vpop.permute.xlu0 %531
    %v534 = vrot.slane %v514, 3
    %v535 = vrot.slane %v516, 2
    %v536 = vsel %vm165, %v535, %v534
    %537 = vrot.lane.b32.xlu0 %v536, 48
    %v538 = vpop.permute.xlu0 %537
    %v540 = vrot.slane %v514, 4
    %v541 = vrot.slane %v516, 3
    %v542 = vsel %vm165, %v541, %v540
    %543 = vrot.lane.b32.xlu0 %v542, 64
    %v544 = vpop.permute.xlu0 %543
    %v546 = vrot.slane %v514, 5
    %v547 = vrot.slane %v516, 4
    %v548 = vsel %vm165, %v547, %v546
    %549 = vrot.lane.b32.xlu0 %v548, 80
    %v550 = vpop.permute.xlu0 %549
    %v552 = vrot.slane %v514, 6
    %v553 = vrot.slane %v516, 5
    %v554 = vsel %vm165, %v553, %v552
    %555 = vrot.lane.b32.xlu0 %v554, 96
    %v556 = vpop.permute.xlu0 %555
    %v558 = vrot.slane %v514, 7
    %v559 = vrot.slane %v516, 6
    %v560 = vsel %vm165, %v559, %v558
    %561 = vrot.lane.b32.xlu0 %v560, 112
    %v562 = vpop.permute.xlu0 %561
    %v564 = vsel %vm388, %v521, %v526
    %v565 = vsel %vm99, %v564, %v532
    %vm566 = vcmask 392192
    %v567 = vsel %vm566, %v565, %v538
    %vm568 = vcmask 523264
    %v569 = vsel %vm568, %v567, %v544
    %vm570 = vcmask 654336
    %v571 = vsel %vm570, %v569, %v550
    %vm572 = vcmask 785408
    %v573 = vsel %vm572, %v571, %v556
    %vm574 = vcmask 916480
    %v575 = vsel %vm574, %v573, %v562
    %576 = vst [vmem:[#allocation7] sm:$0x3] %v575
    // Predicated region
    $region50: #{tpu_custom_call.1} parent=1 // pred_check
      _
    $region51: #{tpu_custom_call.1} parent=1 // pred_check_branch
      %578 = sbr.rel (0) target = $region53
    $region52: #{tpu_custom_call.1} parent=1 // pred_region
      %580 = vsyncadd [#allocation4], 0
      %s582 = sshll.u32 [#allocation7], 4
      %s583 = int_to_ptr.vmem [resolvable:$true] %s582
      %s584 = sshll.u32 %s10, 4
      %s585 = int_to_ptr.hbm [resolvable:$true] %s584
      %587 = dma.vmem_to_hbm [thread:$0]  %s583, 32, %s585, [#allocation4]
    $region53: #{tpu_custom_call.1} parent=1 // pred_fallthru
      _
    // Predicated region
    $region54: #{tpu_custom_call.1} parent=1 // pred_check
      _
    $region55: #{tpu_custom_call.1} parent=1 // pred_check_branch
      %589 = sbr.rel (0) target = $region57
    $region56: #{tpu_custom_call.1} parent=1 // pred_region
      %591 = dma.done [#allocation4], 32
    $region57: #{tpu_custom_call.1} parent=1 // pred_fallthru
      _
    %592 = vsyncpa [#allocation3], 1
    %593 = vsyncpa [#allocation6], 1
    %594 = vsyncpa [#allocation4], 1

</llo_original>
